<compile_context>
chip_gen: v7x
topology: tpu7x:2x2x1
jax: 0.10.0
libtpu: 0.0.40
codegen_flags: <defaults>
</compile_context>

<pallas_src>
import math
import numpy as np
import jax
import jax.numpy as jnp
from jax.experimental import pallas as pl
from jax.experimental.pallas import tpu as pltpu

# ---- model hyper-parameters (POMO defaults, TPU-friendly) --------------------
EMB = 128          # embedding_dim
FF = 512           # ff_hidden_dim
B = 2              # batch
S = 16             # problem / sequence dimension


def _round_up(x, m):
    return (x + m - 1) // m * m


def ffn_kernel(x_ref, w1_ref, b1_ref, w2_ref, b2_ref, o_ref):
    """Fused FFN tile: o = relu(x @ W1 + b1) @ W2 + b2.

    x_ref  : (TM, EMB)  bf16     w1_ref : (EMB, FF) bf16    b1_ref : (1, FF)  f32
    w2_ref : (FF, EMB)  bf16     b2_ref : (1, EMB)  f32     o_ref  : (TM, EMB) f32
    """
    # First matmul on the MXU (bf16 x bf16 -> f32 accumulation).
    h = jnp.dot(x_ref[...], w1_ref[...], preferred_element_type=jnp.float32)
    # Bias + ReLU stay in the f32 accumulator.
    h = jnp.maximum(h + b1_ref[...], 0.0)
    # Cast hidden to bf16: halves the second matmul's LHS read traffic.
    h = h.astype(jnp.bfloat16)
    y = jnp.dot(h, w2_ref[...], preferred_element_type=jnp.float32) + b2_ref[...]
    o_ref[...] = y.astype(o_ref.dtype)


def feed_forward(x, w1, b1, w2, b2, *, tm=512):
    """x: (B, S, EMB); w1: (EMB, FF); b1: (FF,); w2: (FF, EMB); b2: (EMB,)."""
    b_, s_, e = x.shape
    ff = w1.shape[1]
    m = b_ * s_

    # Fuse batch + sequence into one matmul M dimension and cast to bf16.
    x2 = x.reshape(m, e).astype(jnp.bfloat16)
    w1b = w1.astype(jnp.bfloat16)
    w2b = w2.astype(jnp.bfloat16)
    b1_2 = b1.reshape(1, ff).astype(jnp.float32)
    b2_2 = b2.reshape(1, e).astype(jnp.float32)

    # Tile only the M axis; shrink TM for small inputs (sublane-aligned to 8).
    tm = min(tm, _round_up(m, 8))
    m_pad = _round_up(m, tm)
    if m_pad != m:
        x2 = jnp.pad(x2, ((0, m_pad - m), (0, 0)))
    grid = (m_pad // tm,)

    grid_spec = pltpu.PrefetchScalarGridSpec(
        num_scalar_prefetch=0,
        grid=grid,
        in_specs=[
            # Activation tiles stream over the M axis (double-buffered).
            pl.BlockSpec((tm, e), lambda i: (i, 0)),
            # Weights / biases: constant block index -> DMA'd once, VMEM-resident.
            pl.BlockSpec((e, ff), lambda i: (0, 0)),
            pl.BlockSpec((1, ff), lambda i: (0, 0)),
            pl.BlockSpec((ff, e), lambda i: (0, 0)),
            pl.BlockSpec((1, e), lambda i: (0, 0)),
        ],
        # Output: tile only M, keep full lane-dense EMB=128 last dim.
        out_specs=pl.BlockSpec((tm, e), lambda i: (i, 0)),
    )

    flops = 4 * m_pad * e * ff  # two matmuls, 2*M*K*N each
    bytes_accessed = (
        x2.size * 2 + w1b.size * 2 + w2b.size * 2
        + b1_2.size * 4 + b2_2.size * 4 + m_pad * e * 4
    )

    out = pl.pallas_call(
        ffn_kernel,
        out_shape=jax.ShapeDtypeStruct((m_pad, e), jnp.float32),
        grid_spec=grid_spec,
        compiler_params=pltpu.CompilerParams(
            # Independent M tiles -> shard across TensorCores on v7x.
            dimension_semantics=("parallel",),
            vmem_limit_bytes=32 * 1024 * 1024,
        ),
        cost_estimate=pl.CostEstimate(
            flops=flops, transcendentals=0, bytes_accessed=bytes_accessed),
    )(x2, w1b, b1_2, w2b, b2_2)

    return out[:m].reshape(b_, s_, e).astype(x.dtype)


# ------------------------- references ----------------------------------------
def reference_forward_f32(x, w1, b1, w2, b2):
    h = jnp.maximum(x @ w1 + b1, 0.0)
    return h @ w2 + b2


def reference_forward_bf16(x, w1, b1, w2, b2):
    # Mirrors the kernel's precision path: bf16 operands, f32 accumulation.
    xb = x.astype(jnp.bfloat16)
    h = jnp.dot(xb, w1.astype(jnp.bfloat16), preferred_element_type=jnp.float32)
    h = jnp.maximum(h + b1, 0.0).astype(jnp.bfloat16)
    y = jnp.dot(h, w2.astype(jnp.bfloat16), preferred_element_type=jnp.float32)
    return y + b2


if __name__ == "__main__":
    key = jax.random.PRNGKey(0)
    k0, k1, k2, k3, k4 = jax.random.split(key, 5)

    # deterministic parameter init; weights stored as (in_features, out_features)
    w1 = jax.random.normal(k0, (EMB, FF), jnp.float32) / math.sqrt(float(EMB))
    b1 = jax.random.normal(k1, (FF,), jnp.float32) / math.sqrt(float(EMB))
    w2 = jax.random.normal(k2, (FF, EMB), jnp.float32) / math.sqrt(float(FF))
    b2 = jax.random.normal(k3, (EMB,), jnp.float32) / math.sqrt(float(FF))

    # input: (batch, problem, embedding_dim)
    x = jax.random.normal(k4, (B, S, EMB), jnp.float32)

    out = feed_forward(x, w1, b1, w2, b2)
    out = jax.block_until_ready(out)
    assert out.shape == (B, S, EMB)

    # Precision-faithful check (same bf16/f32-accum path as the kernel).
    ref_bf16 = reference_forward_bf16(x, w1, b1, w2, b2)
    assert np.allclose(np.asarray(out), np.asarray(ref_bf16), atol=2e-3, rtol=2e-3)

    # Semantic check against the original f32 module (looser tol for bf16 cast).
    ref_f32 = reference_forward_f32(x, w1, b1, w2, b2)
    assert np.allclose(np.asarray(out), np.asarray(ref_f32), atol=5e-2, rtol=5e-2)

    print("KERNEL_OK")
</pallas_src>

<mosaic_0001>
module attributes {stable_mosaic.version = 11 : i64} {
  func.func @ffn_kernel(%arg0: i32, %arg1: memref<32x128xbf16, #tpu.memory_space<vmem>>, %arg2: memref<128x512xbf16, #tpu.memory_space<vmem>>, %arg3: memref<1x512xf32, #tpu.memory_space<vmem>>, %arg4: memref<512x128xbf16, #tpu.memory_space<vmem>>, %arg5: memref<1x128xf32, #tpu.memory_space<vmem>>, %arg6: memref<32x128xf32, #tpu.memory_space<vmem>>) attributes {dimension_semantics = [#tpu.dimension_semantics<parallel>], iteration_bounds = array<i64: 1>, scalar_prefetch = 0 : i64, scratch_operands = 0 : i64, tpu.core_type = #tpu.core_type<tc>, window_params = [{transform_indices = @transform_0, window_bounds = array<i64: 32, 128>}, {pipeline_mode = #tpu.pipeline_mode<synchronous>, transform_indices = @transform_1, window_bounds = array<i64: 128, 512>}, {pipeline_mode = #tpu.pipeline_mode<synchronous>, transform_indices = @transform_2, window_bounds = array<i64: 1, 512>}, {pipeline_mode = #tpu.pipeline_mode<synchronous>, transform_indices = @transform_3, window_bounds = array<i64: 512, 128>}, {pipeline_mode = #tpu.pipeline_mode<synchronous>, transform_indices = @transform_4, window_bounds = array<i64: 1, 128>}, {transform_indices = @transform_5, window_bounds = array<i64: 32, 128>}]} {
    %c0 = arith.constant 0 : index
    %c0_0 = arith.constant 0 : index
    %0 = vector.load %arg1[%c0, %c0_0] : memref<32x128xbf16, #tpu.memory_space<vmem>>, vector<32x128xbf16>
    %c0_1 = arith.constant 0 : index
    %c0_2 = arith.constant 0 : index
    %1 = vector.load %arg2[%c0_1, %c0_2] : memref<128x512xbf16, #tpu.memory_space<vmem>>, vector<128x512xbf16>
    %cst = arith.constant dense<0.000000e+00> : vector<32x512xf32>
    %2 = tpu.matmul %0, %1, %cst {dimension_numbers = #tpu.dot_dimension_numbers<[1], [0], [0], [1], [0, 0, 1, 1], [], []>} : vector<32x128xbf16>, vector<128x512xbf16>, vector<32x512xf32> -> vector<32x512xf32>
    %c0_3 = arith.constant 0 : index
    %c0_4 = arith.constant 0 : index
    %3 = vector.load %arg3[%c0_3, %c0_4] : memref<1x512xf32, #tpu.memory_space<vmem>>, vector<1x512xf32>
    %4 = vector.broadcast %3 : vector<1x512xf32> to vector<32x512xf32>
    %5 = arith.addf %2, %4 : vector<32x512xf32>
    %cst_5 = arith.constant 0.000000e+00 : f32
    %6 = vector.broadcast %cst_5 : f32 to vector<32x512xf32>
    %7 = arith.maximumf %5, %6 : vector<32x512xf32>
    %8 = arith.truncf %7 : vector<32x512xf32> to vector<32x512xbf16>
    %c0_6 = arith.constant 0 : index
    %c0_7 = arith.constant 0 : index
    %9 = vector.load %arg4[%c0_6, %c0_7] : memref<512x128xbf16, #tpu.memory_space<vmem>>, vector<512x128xbf16>
    %cst_8 = arith.constant dense<0.000000e+00> : vector<32x128xf32>
    %10 = tpu.matmul %8, %9, %cst_8 {dimension_numbers = #tpu.dot_dimension_numbers<[1], [0], [0], [1], [0, 0, 1, 1], [], []>} : vector<32x512xbf16>, vector<512x128xbf16>, vector<32x128xf32> -> vector<32x128xf32>
    %c0_9 = arith.constant 0 : index
    %c0_10 = arith.constant 0 : index
    %11 = vector.load %arg5[%c0_9, %c0_10] : memref<1x128xf32, #tpu.memory_space<vmem>>, vector<1x128xf32>
    %12 = vector.broadcast %11 : vector<1x128xf32> to vector<32x128xf32>
    %13 = arith.addf %10, %12 : vector<32x128xf32>
    %c0_11 = arith.constant 0 : index
    %c0_12 = arith.constant 0 : index
    %14 = vector.load %arg6[%c0_11, %c0_12] : memref<32x128xf32, #tpu.memory_space<vmem>>, vector<32x128xf32>
    tpu.vector_store %arg6[%c0_11, %c0_12], %13 {strides = array<i32>} : memref<32x128xf32, #tpu.memory_space<vmem>>, vector<32x128xf32>,
    return
  }
  func.func @transform_0(%arg0: i32) -> (i32, i32) {
    %c0_i32 = arith.constant 0 : i32
    %c0_i32_0 = arith.constant 0 : i32
    return %arg0, %c0_i32 : i32, i32
  }
  func.func @transform_1(%arg0: i32) -> (i32, i32) {
    %c0_i32 = arith.constant 0 : i32
    %c0_i32_0 = arith.constant 0 : i32
    %c0_i32_1 = arith.constant 0 : i32
    return %c0_i32, %c0_i32_0 : i32, i32
  }
  func.func @transform_2(%arg0: i32) -> (i32, i32) {
    %c0_i32 = arith.constant 0 : i32
    %c0_i32_0 = arith.constant 0 : i32
    %c0_i32_1 = arith.constant 0 : i32
    return %c0_i32, %c0_i32_0 : i32, i32
  }
  func.func @transform_3(%arg0: i32) -> (i32, i32) {
    %c0_i32 = arith.constant 0 : i32
    %c0_i32_0 = arith.constant 0 : i32
    %c0_i32_1 = arith.constant 0 : i32
    return %c0_i32, %c0_i32_0 : i32, i32
  }
  func.func @transform_4(%arg0: i32) -> (i32, i32) {
    %c0_i32 = arith.constant 0 : i32
    %c0_i32_0 = arith.constant 0 : i32
    %c0_i32_1 = arith.constant 0 : i32
    return %c0_i32, %c0_i32_0 : i32, i32
  }
  func.func @transform_5(%arg0: i32) -> (i32, i32) {
    %c0_i32 = arith.constant 0 : i32
    %c0_i32_0 = arith.constant 0 : i32
    return %arg0, %c0_i32 : i32, i32
  }
}

</mosaic_0001>

<llo_original>
// kernel: tpu_custom_call.1
$region0: #{tpu_custom_call.1}
  #allocation0 [shape = 'u32[]', space=smem, size = 0x4, offset = 0x4, fixed_abs, tag = 'smem constant byte address 0x4 - core index']
  #allocation1 [shape = 'u32[144,128]{1,0:T(1,128)}', space=vmem, size = 0x12000, scoped, tag = 'internal scratch']
  %s0 = inlined_call_operand.hbm [shape: bf16[32,128], index: 0, kind: input, shape index: {}]
  %s1 = inlined_call_operand.hbm [shape: bf16[128,512], index: 1, kind: input, shape index: {}]
  %s2 = inlined_call_operand.vmem [shape: f32[1,512], index: 2, kind: input, shape index: {}]
  %s3 = inlined_call_operand.hbm [shape: bf16[512,128], index: 3, kind: input, shape index: {}]
  %s4 = inlined_call_operand.vmem [shape: f32[1,128], index: 4, kind: input, shape index: {}]
  %s5 = inlined_call_operand.hbm [shape: f32[32,128], index: 5, kind: output, shape index: {}]
  %s6 = sld [smem:[#allocation0]]
  $region42: #{tpu_custom_call.1} parent=0
    _
  %s8 = ssub.s32 1, %s6
  %s9 = scalar_select 0, %s8, %s6
  $region1: #{tpu_custom_call.1} parent=0
    #allocation2 [shape = 'u8[8192]{0}', space=vmem, size = 0x2000, scoped, tag = 'input window, operand 0, single buffered']
    #allocation3 [shape = 's32[1]{0}', space=sflag, size = 0x4, scoped, tag = 'scoped memory for tpu_custom_call.1']
    #allocation4 [shape = 's32[1]{0}', space=sflag, size = 0x4, scoped, tag = 'scoped memory for tpu_custom_call.1']
    #allocation5 [shape = 'u8[131072]{0}', space=vmem, size = 0x20000, scoped, tag = 'input window, operand 1, single buffered']
    #allocation6 [shape = 's32[1]{0}', space=sflag, size = 0x4, scoped, tag = 'scoped memory for tpu_custom_call.1']
    #allocation7 [shape = 'u8[131072]{0}', space=vmem, size = 0x20000, scoped, tag = 'input window, operand 3, single buffered']
    #allocation8 [shape = 'u8[16384]{0}', space=vmem, size = 0x4000, scoped, tag = 'output window, operand 0, single buffered']
    %10 = vsyncpa [#allocation3], 0
    %11 = vsyncpa [#allocation6], 0
    %12 = vsyncpa [#allocation4], 0
    // Predicated region
    $region2: #{tpu_custom_call.1} parent=1 // pred_check
      _
    $region3: #{tpu_custom_call.1} parent=1 // pred_check_branch
      %14 = sbr.rel (0) target = $region5
    $region4: #{tpu_custom_call.1} parent=1 // pred_region
      %s16 = ssub.s32 256, 256
      %17 = vsyncadd [#allocation3], %s16
      %s18 = sshll.u32 [#allocation2], 4
      %s19 = int_to_ptr.vmem [resolvable:$true] %s18
      %24 = dma.hbm_to_vmem [thread:$0]  %s0, 256, %s19, [#allocation3], 64, 64, 4
    $region5: #{tpu_custom_call.1} parent=1 // pred_fallthru
      _
    // Predicated region
    $region6: #{tpu_custom_call.1} parent=1 // pred_check
      _
    $region7: #{tpu_custom_call.1} parent=1 // pred_check_branch
      %26 = sbr.rel (0) target = $region9
    $region8: #{tpu_custom_call.1} parent=1 // pred_region
      %s28 = ssub.s32 4096, 4096
      %29 = vsyncadd [#allocation6], %s28
      %s30 = sshll.u32 [#allocation5], 4
      %s31 = int_to_ptr.vmem [resolvable:$true] %s30
      %36 = dma.hbm_to_vmem [thread:$0]  %s1, 4096, %s31, [#allocation6], 256, 256, 16
    $region9: #{tpu_custom_call.1} parent=1 // pred_fallthru
      _
    // Predicated region
    $region10: #{tpu_custom_call.1} parent=1 // pred_check
      _
    $region11: #{tpu_custom_call.1} parent=1 // pred_check_branch
      %38 = sbr.rel (0) target = $region13
    $region12: #{tpu_custom_call.1} parent=1 // pred_region
      _
    $region13: #{tpu_custom_call.1} parent=1 // pred_fallthru
      _
    // Predicated region
    $region14: #{tpu_custom_call.1} parent=1 // pred_check
      _
    $region15: #{tpu_custom_call.1} parent=1 // pred_check_branch
      %40 = sbr.rel (0) target = $region17
    $region16: #{tpu_custom_call.1} parent=1 // pred_region
      %s42 = ssub.s32 4096, 4096
      %43 = vsyncadd [#allocation6], %s42
      %s44 = sshll.u32 [#allocation7], 4
      %s45 = int_to_ptr.vmem [resolvable:$true] %s44
      %50 = dma.hbm_to_vmem [thread:$0]  %s3, 4096, %s45, [#allocation6], 64, 64, 4
    $region17: #{tpu_custom_call.1} parent=1 // pred_fallthru
      _
    // Predicated region
    $region18: #{tpu_custom_call.1} parent=1 // pred_check
      _
    $region19: #{tpu_custom_call.1} parent=1 // pred_check_branch
      %52 = sbr.rel (0) target = $region21
    $region20: #{tpu_custom_call.1} parent=1 // pred_region
      _
    $region21: #{tpu_custom_call.1} parent=1 // pred_fallthru
      _
    // Predicated region
    $region22: #{tpu_custom_call.1} parent=1 // pred_check
      _
    $region23: #{tpu_custom_call.1} parent=1 // pred_check_branch
      %54 = sbr.rel (0) target = $region25
    $region24: #{tpu_custom_call.1} parent=1 // pred_region
      %55 = dma.done [#allocation3], 256
    $region25: #{tpu_custom_call.1} parent=1 // pred_fallthru
      _
    // Predicated region
    $region26: #{tpu_custom_call.1} parent=1 // pred_check
      _
    $region27: #{tpu_custom_call.1} parent=1 // pred_check_branch
      %57 = sbr.rel (0) target = $region29
    $region28: #{tpu_custom_call.1} parent=1 // pred_region
      %58 = dma.done [#allocation6], 4096
    $region29: #{tpu_custom_call.1} parent=1 // pred_fallthru
      _
    // Predicated region
    $region30: #{tpu_custom_call.1} parent=1 // pred_check
      _
    $region31: #{tpu_custom_call.1} parent=1 // pred_check_branch
      %60 = sbr.rel (0) target = $region33
    $region32: #{tpu_custom_call.1} parent=1 // pred_region
      %61 = dma.done [#allocation6], 4096
    $region33: #{tpu_custom_call.1} parent=1 // pred_fallthru
      _
    %v63 = vld [vmem:[#allocation2] sm:$0xf]
    %v64 = vld [vmem:[#allocation2 + $0x4] sm:$0xf]
    %v65 = vld [vmem:[#allocation2 + $0x8] sm:$0xf]
    %v66 = vld [vmem:[#allocation2 + $0xc] sm:$0xf]
    %v67 = vld [vmem:[#allocation5] sm:$0xff]
    %v68 = vld [vmem:[#allocation5 + $0x8] sm:$0xff]
    %v69 = vld [vmem:[#allocation5 + $0x10] sm:$0xff]
    %v70 = vld [vmem:[#allocation5 + $0x18] sm:$0xff]
    %v71 = vld [vmem:[#allocation5 + $0x20] sm:$0xff]
    %v72 = vld [vmem:[#allocation5 + $0x28] sm:$0xff]
    %v73 = vld [vmem:[#allocation5 + $0x30] sm:$0xff]
    %v74 = vld [vmem:[#allocation5 + $0x38] sm:$0xff]
    %v75 = vld [vmem:[#allocation5 + $0x40] sm:$0xff]
    %v76 = vld [vmem:[#allocation5 + $0x48] sm:$0xff]
    %v77 = vld [vmem:[#allocation5 + $0x50] sm:$0xff]
    %v78 = vld [vmem:[#allocation5 + $0x58] sm:$0xff]
    %v79 = vld [vmem:[#allocation5 + $0x60] sm:$0xff]
    %v80 = vld [vmem:[#allocation5 + $0x68] sm:$0xff]
    %v81 = vld [vmem:[#allocation5 + $0x70] sm:$0xff]
    %v82 = vld [vmem:[#allocation5 + $0x78] sm:$0xff]
    %v83 = vld [vmem:[#allocation5 + $0x80] sm:$0xff]
    %v84 = vld [vmem:[#allocation5 + $0x88] sm:$0xff]
    %v85 = vld [vmem:[#allocation5 + $0x90] sm:$0xff]
    %v86 = vld [vmem:[#allocation5 + $0x98] sm:$0xff]
    %v87 = vld [vmem:[#allocation5 + $0xa0] sm:$0xff]
    %v88 = vld [vmem:[#allocation5 + $0xa8] sm:$0xff]
    %v89 = vld [vmem:[#allocation5 + $0xb0] sm:$0xff]
    %v90 = vld [vmem:[#allocation5 + $0xb8] sm:$0xff]
    %v91 = vld [vmem:[#allocation5 + $0xc0] sm:$0xff]
    %v92 = vld [vmem:[#allocation5 + $0xc8] sm:$0xff]
    %v93 = vld [vmem:[#allocation5 + $0xd0] sm:$0xff]
    %v94 = vld [vmem:[#allocation5 + $0xd8] sm:$0xff]
    %v95 = vld [vmem:[#allocation5 + $0xe0] sm:$0xff]
    %v96 = vld [vmem:[#allocation5 + $0xe8] sm:$0xff]
    %v97 = vld [vmem:[#allocation5 + $0xf0] sm:$0xff]
    %v98 = vld [vmem:[#allocation5 + $0xf8] sm:$0xff]
    %v99 = vld [vmem:[%s2] sm:$0xf]
    %v101 = vlaneseq
    %v102 = vshrl.u32 %v101, 7
    %v103 = vsub.s32 0, %v102
    %v104 = vrot.slane %v99, %v103
    %v105 = vlaneseq
    %v106 = vshrl.u32 %v105, 7
    %v107 = vsub.s32 1, %v106
    %v108 = vrot.slane %v99, %v107
    %v109 = vlaneseq
    %v110 = vshrl.u32 %v109, 7
    %v111 = vsub.s32 2, %v110
    %v112 = vrot.slane %v99, %v111
    %v113 = vlaneseq
    %v114 = vshrl.u32 %v113, 7
    %v115 = vsub.s32 3, %v114
    %v116 = vrot.slane %v99, %v115
    %v125 = vunpack.c.l.b16 %v63
    %v126 = vunpack.c.l.b16 %v64
    %v127 = vunpack.c.l.b16 %v65
    %v128 = vunpack.c.l.b16 %v66
    %v129 = vpack.c.b16 %v126, %v125
    %v130 = vpack.c.b16 %v128, %v127
    %v165 = vunpack.c.l.b16 %v67
    %v166 = vunpack.c.h.b16 %v67
    %v167 = vunpack.c.l.b16 %v68
    %v168 = vunpack.c.h.b16 %v68
    %v169 = vunpack.c.l.b16 %v69
    %v170 = vunpack.c.h.b16 %v69
    %v171 = vunpack.c.l.b16 %v70
    %v172 = vunpack.c.h.b16 %v70
    %v173 = vunpack.c.l.b16 %v71
    %v174 = vunpack.c.h.b16 %v71
    %v175 = vunpack.c.l.b16 %v72
    %v176 = vunpack.c.h.b16 %v72
    %v177 = vunpack.c.l.b16 %v73
    %v178 = vunpack.c.h.b16 %v73
    %v179 = vunpack.c.l.b16 %v74
    %v180 = vunpack.c.h.b16 %v74
    %v181 = vunpack.c.l.b16 %v75
    %v182 = vunpack.c.h.b16 %v75
    %v183 = vunpack.c.l.b16 %v76
    %v184 = vunpack.c.h.b16 %v76
    %v185 = vunpack.c.l.b16 %v77
    %v186 = vunpack.c.h.b16 %v77
    %v187 = vunpack.c.l.b16 %v78
    %v188 = vunpack.c.h.b16 %v78
    %v189 = vunpack.c.l.b16 %v79
    %v190 = vunpack.c.h.b16 %v79
    %v191 = vunpack.c.l.b16 %v80
    %v192 = vunpack.c.h.b16 %v80
    %v193 = vunpack.c.l.b16 %v81
    %v194 = vunpack.c.h.b16 %v81
    %v195 = vunpack.c.l.b16 %v82
    %v196 = vunpack.c.h.b16 %v82
    %v197 = vunpack.c.l.b16 %v83
    %v198 = vunpack.c.h.b16 %v83
    %v199 = vunpack.c.l.b16 %v84
    %v200 = vunpack.c.h.b16 %v84
    %v201 = vunpack.c.l.b16 %v85
    %v202 = vunpack.c.h.b16 %v85
    %v203 = vunpack.c.l.b16 %v86
    %v204 = vunpack.c.h.b16 %v86
    %v205 = vunpack.c.l.b16 %v87
    %v206 = vunpack.c.h.b16 %v87
    %v207 = vunpack.c.l.b16 %v88
    %v208 = vunpack.c.h.b16 %v88
    %v209 = vunpack.c.l.b16 %v89
    %v210 = vunpack.c.h.b16 %v89
    %v211 = vunpack.c.l.b16 %v90
    %v212 = vunpack.c.h.b16 %v90
    %v213 = vunpack.c.l.b16 %v91
    %v214 = vunpack.c.h.b16 %v91
    %v215 = vunpack.c.l.b16 %v92
    %v216 = vunpack.c.h.b16 %v92
    %v217 = vunpack.c.l.b16 %v93
    %v218 = vunpack.c.h.b16 %v93
    %v219 = vunpack.c.l.b16 %v94
    %v220 = vunpack.c.h.b16 %v94
    %v221 = vunpack.c.l.b16 %v95
    %v222 = vunpack.c.h.b16 %v95
    %v223 = vunpack.c.l.b16 %v96
    %v224 = vunpack.c.h.b16 %v96
    %v225 = vunpack.c.l.b16 %v97
    %v226 = vunpack.c.h.b16 %v97
    %v227 = vunpack.c.l.b16 %v98
    %v228 = vunpack.c.h.b16 %v98
    %v229 = vpack.c.b16 %v169, %v165
    %v230 = vpack.c.b16 %v170, %v166
    %v231 = vpack.c.b16 %v171, %v167
    %v232 = vpack.c.b16 %v172, %v168
    %v233 = vpack.c.b16 %v177, %v173
    %v234 = vpack.c.b16 %v178, %v174
    %v235 = vpack.c.b16 %v179, %v175
    %v236 = vpack.c.b16 %v180, %v176
    %v237 = vpack.c.b16 %v185, %v181
    %v238 = vpack.c.b16 %v186, %v182
    %v239 = vpack.c.b16 %v187, %v183
    %v240 = vpack.c.b16 %v188, %v184
    %v241 = vpack.c.b16 %v193, %v189
    %v242 = vpack.c.b16 %v194, %v190
    %v243 = vpack.c.b16 %v195, %v191
    %v244 = vpack.c.b16 %v196, %v192
    %v245 = vpack.c.b16 %v201, %v197
    %v246 = vpack.c.b16 %v202, %v198
    %v247 = vpack.c.b16 %v203, %v199
    %v248 = vpack.c.b16 %v204, %v200
    %v249 = vpack.c.b16 %v209, %v205
    %v250 = vpack.c.b16 %v210, %v206
    %v251 = vpack.c.b16 %v211, %v207
    %v252 = vpack.c.b16 %v212, %v208
    %v253 = vpack.c.b16 %v217, %v213
    %v254 = vpack.c.b16 %v218, %v214
    %v255 = vpack.c.b16 %v219, %v215
    %v256 = vpack.c.b16 %v220, %v216
    %v257 = vpack.c.b16 %v225, %v221
    %v258 = vpack.c.b16 %v226, %v222
    %v259 = vpack.c.b16 %v227, %v223
    %v260 = vpack.c.b16 %v228, %v224
    %293 = vmatprep.subr.bf16.mxu0 %v230
    %294 = vmatpush1.bf16.msra.mxu0 %v229
    %295 = vmatprep.subr.bf16.mxu0 %v234
    %296 = vmatpush1.bf16.msra.mxu0 %v233
    %297 = vmatprep.subr.bf16.mxu0 %v238
    %298 = vmatpush1.bf16.msra.mxu0 %v237
    %299 = vmatprep.subr.bf16.mxu0 %v242
    %300 = vmatpush1.bf16.msra.mxu0 %v241
    %301 = vmatprep.subr.bf16.mxu0 %v246
    %302 = vmatpush1.bf16.msra.mxu0 %v245
    %303 = vmatprep.subr.bf16.mxu0 %v250
    %304 = vmatpush1.bf16.msra.mxu0 %v249
    %305 = vmatprep.subr.bf16.mxu0 %v254
    %306 = vmatpush1.bf16.msra.mxu0 %v253
    %307 = vmatprep.subr.bf16.mxu0 %v258
    %308 = vmatpush1.bf16.msra.mxu0 %v257
    %309 = vmatprep.subr.bf16.mxu0 0
    %310 = vmatpush1.bf16.msra.mxu0 0
    %311 = vmatprep.subr.bf16.mxu0 0
    %312 = vmatpush1.bf16.msra.mxu0 0
    %313 = vmatprep.subr.bf16.mxu0 0
    %314 = vmatpush1.bf16.msra.mxu0 0
    %315 = vmatprep.subr.bf16.mxu0 0
    %316 = vmatpush1.bf16.msra.mxu0 0
    %317 = vmatprep.subr.bf16.mxu0 0
    %318 = vmatpush1.bf16.msra.mxu0 0
    %319 = vmatprep.subr.bf16.mxu0 0
    %320 = vmatpush1.bf16.msra.mxu0 0
    %321 = vmatprep.subr.bf16.mxu0 0
    %322 = vmatpush1.bf16.msra.mxu0 0
    %323 = vmatprep.subr.bf16.mxu0 0
    %324 = vmatpush1.bf16.msra.mxu0 0
    %325 = vmatprep.mubr.bf16.mxu0 0
    %326 = vmatmul.mubr.bf16.gmra.mrb[0].mxu0 %v129
    %v327 = vpop.f32.mrb[0].mxu0
    %v328 = vadd.f32 %v104, %v327
    %v329 = vpop.f32.mrb[0].mxu0
    %v330 = vadd.f32 %v108, %v329
    %v331 = vpop.f32.mrb[0].mxu0
    %v332 = vadd.f32 %v104, %v331
    %v333 = vpop.f32.mrb[0].mxu0
    %v334 = vadd.f32 %v108, %v333
    %335 = vmatprep.mubr.bf16.mxu0 0
    %336 = vmatmul.mubr.bf16.gmra.mrb[0].mxu0 %v130
    %v337 = vpop.f32.mrb[0].mxu0
    %v338 = vadd.f32 %v104, %v337
    %v339 = vpop.f32.mrb[0].mxu0
    %v340 = vadd.f32 %v108, %v339
    %v341 = vpop.f32.mrb[0].mxu0
    %v342 = vadd.f32 %v104, %v341
    %v343 = vpop.f32.mrb[0].mxu0
    %v344 = vadd.f32 %v108, %v343
    %345 = vdwg.mxu0
    %346 = vmatprep.subr.bf16.mxu0 %v232
    %347 = vmatpush1.bf16.msra.mxu0 %v231
    %348 = vmatprep.subr.bf16.mxu0 %v236
    %349 = vmatpush1.bf16.msra.mxu0 %v235
    %350 = vmatprep.subr.bf16.mxu0 %v240
    %351 = vmatpush1.bf16.msra.mxu0 %v239
    %352 = vmatprep.subr.bf16.mxu0 %v244
    %353 = vmatpush1.bf16.msra.mxu0 %v243
    %354 = vmatprep.subr.bf16.mxu0 %v248
    %355 = vmatpush1.bf16.msra.mxu0 %v247
    %356 = vmatprep.subr.bf16.mxu0 %v252
    %357 = vmatpush1.bf16.msra.mxu0 %v251
    %358 = vmatprep.subr.bf16.mxu0 %v256
    %359 = vmatpush1.bf16.msra.mxu0 %v255
    %360 = vmatprep.subr.bf16.mxu0 %v260
    %361 = vmatpush1.bf16.msra.mxu0 %v259
    %362 = vmatprep.subr.bf16.mxu0 0
    %363 = vmatpush1.bf16.msra.mxu0 0
    %364 = vmatprep.subr.bf16.mxu0 0
    %365 = vmatpush1.bf16.msra.mxu0 0
    %366 = vmatprep.subr.bf16.mxu0 0
    %367 = vmatpush1.bf16.msra.mxu0 0
    %368 = vmatprep.subr.bf16.mxu0 0
    %369 = vmatpush1.bf16.msra.mxu0 0
    %370 = vmatprep.subr.bf16.mxu0 0
    %371 = vmatpush1.bf16.msra.mxu0 0
    %372 = vmatprep.subr.bf16.mxu0 0
    %373 = vmatpush1.bf16.msra.mxu0 0
    %374 = vmatprep.subr.bf16.mxu0 0
    %375 = vmatpush1.bf16.msra.mxu0 0
    %376 = vmatprep.subr.bf16.mxu0 0
    %377 = vmatpush1.bf16.msra.mxu0 0
    %378 = vmatprep.mubr.bf16.mxu0 0
    %379 = vmatmul.mubr.bf16.gmra.mrb[0].mxu0 %v129
    %v380 = vpop.f32.mrb[0].mxu0
    %v381 = vadd.f32 %v112, %v380
    %v382 = vpop.f32.mrb[0].mxu0
    %v383 = vadd.f32 %v116, %v382
    %v384 = vpop.f32.mrb[0].mxu0
    %v385 = vadd.f32 %v112, %v384
    %v386 = vpop.f32.mrb[0].mxu0
    %v387 = vadd.f32 %v116, %v386
    %388 = vmatprep.mubr.bf16.mxu0 0
    %389 = vmatmul.mubr.bf16.gmra.mrb[0].mxu0 %v130
    %v390 = vpop.f32.mrb[0].mxu0
    %v391 = vadd.f32 %v112, %v390
    %v392 = vpop.f32.mrb[0].mxu0
    %v393 = vadd.f32 %v116, %v392
    %v394 = vpop.f32.mrb[0].mxu0
    %v395 = vadd.f32 %v112, %v394
    %v396 = vpop.f32.mrb[0].mxu0
    %v397 = vadd.f32 %v116, %v396
    %398 = vdwg.mxu0
    %v399 = vmax.f32 %v328, 0.0
    %v400 = vmax.f32 %v330, 0.0
    %v401 = vmax.f32 %v381, 0.0
    %v402 = vmax.f32 %v383, 0.0
    %v403 = vmax.f32 %v332, 0.0
    %v404 = vmax.f32 %v334, 0.0
    %v405 = vmax.f32 %v385, 0.0
    %v406 = vmax.f32 %v387, 0.0
    %v407 = vmax.f32 %v338, 0.0
    %v408 = vmax.f32 %v340, 0.0
    %v409 = vmax.f32 %v391, 0.0
    %v410 = vmax.f32 %v393, 0.0
    %v411 = vmax.f32 %v342, 0.0
    %v412 = vmax.f32 %v344, 0.0
    %v413 = vmax.f32 %v395, 0.0
    %v414 = vmax.f32 %v397, 0.0
    %v415 = vpack.c.bf16 %v403, %v399
    %v416 = vpack.c.bf16 %v404, %v400
    %v417 = vpack.c.bf16 %v405, %v401
    %v418 = vpack.c.bf16 %v406, %v402
    %v419 = vpack.c.bf16 %v411, %v407
    %v420 = vpack.c.bf16 %v412, %v408
    %v421 = vpack.c.bf16 %v413, %v409
    %v422 = vpack.c.bf16 %v414, %v410
    %v423 = vld [vmem:[#allocation7] sm:$0xf]
    %v424 = vld [vmem:[#allocation7 + $0x4] sm:$0xf]
    %v425 = vld [vmem:[#allocation7 + $0x8] sm:$0xf]
    %v426 = vld [vmem:[#allocation7 + $0xc] sm:$0xf]
    %v427 = vld [vmem:[#allocation7 + $0x10] sm:$0xf]
    %v428 = vld [vmem:[#allocation7 + $0x14] sm:$0xf]
    %v429 = vld [vmem:[#allocation7 + $0x18] sm:$0xf]
    %v430 = vld [vmem:[#allocation7 + $0x1c] sm:$0xf]
    %v431 = vld [vmem:[#allocation7 + $0x20] sm:$0xf]
    %v432 = vld [vmem:[#allocation7 + $0x24] sm:$0xf]
    %v433 = vld [vmem:[#allocation7 + $0x28] sm:$0xf]
    %v434 = vld [vmem:[#allocation7 + $0x2c] sm:$0xf]
    %v435 = vld [vmem:[#allocation7 + $0x30] sm:$0xf]
    %v436 = vld [vmem:[#allocation7 + $0x34] sm:$0xf]
    %v437 = vld [vmem:[#allocation7 + $0x38] sm:$0xf]
    %v438 = vld [vmem:[#allocation7 + $0x3c] sm:$0xf]
    %v439 = vld [vmem:[#allocation7 + $0x40] sm:$0xf]
    %v440 = vld [vmem:[#allocation7 + $0x44] sm:$0xf]
    %v441 = vld [vmem:[#allocation7 + $0x48] sm:$0xf]
    %v442 = vld [vmem:[#allocation7 + $0x4c] sm:$0xf]
    %v443 = vld [vmem:[#allocation7 + $0x50] sm:$0xf]
    %v444 = vld [vmem:[#allocation7 + $0x54] sm:$0xf]
    %v445 = vld [vmem:[#allocation7 + $0x58] sm:$0xf]
    %v446 = vld [vmem:[#allocation7 + $0x5c] sm:$0xf]
    %v447 = vld [vmem:[#allocation7 + $0x60] sm:$0xf]
    %v448 = vld [vmem:[#allocation7 + $0x64] sm:$0xf]
    %v449 = vld [vmem:[#allocation7 + $0x68] sm:$0xf]
    %v450 = vld [vmem:[#allocation7 + $0x6c] sm:$0xf]
    %v451 = vld [vmem:[#allocation7 + $0x70] sm:$0xf]
    %v452 = vld [vmem:[#allocation7 + $0x74] sm:$0xf]
    %v453 = vld [vmem:[#allocation7 + $0x78] sm:$0xf]
    %v454 = vld [vmem:[#allocation7 + $0x7c] sm:$0xf]
    %v455 = vld [vmem:[#allocation7 + $0x80] sm:$0xf]
    %v456 = vld [vmem:[#allocation7 + $0x84] sm:$0xf]
    %v457 = vld [vmem:[#allocation7 + $0x88] sm:$0xf]
    %v458 = vld [vmem:[#allocation7 + $0x8c] sm:$0xf]
    %v459 = vld [vmem:[#allocation7 + $0x90] sm:$0xf]
    %v460 = vld [vmem:[#allocation7 + $0x94] sm:$0xf]
    %v461 = vld [vmem:[#allocation7 + $0x98] sm:$0xf]
    %v462 = vld [vmem:[#allocation7 + $0x9c] sm:$0xf]
    %v463 = vld [vmem:[#allocation7 + $0xa0] sm:$0xf]
    %v464 = vld [vmem:[#allocation7 + $0xa4] sm:$0xf]
    %v465 = vld [vmem:[#allocation7 + $0xa8] sm:$0xf]
    %v466 = vld [vmem:[#allocation7 + $0xac] sm:$0xf]
    %v467 = vld [vmem:[#allocation7 + $0xb0] sm:$0xf]
    %v468 = vld [vmem:[#allocation7 + $0xb4] sm:$0xf]
    %v469 = vld [vmem:[#allocation7 + $0xb8] sm:$0xf]
    %v470 = vld [vmem:[#allocation7 + $0xbc] sm:$0xf]
    %v471 = vld [vmem:[#allocation7 + $0xc0] sm:$0xf]
    %v472 = vld [vmem:[#allocation7 + $0xc4] sm:$0xf]
    %v473 = vld [vmem:[#allocation7 + $0xc8] sm:$0xf]
    %v474 = vld [vmem:[#allocation7 + $0xcc] sm:$0xf]
    %v475 = vld [vmem:[#allocation7 + $0xd0] sm:$0xf]
    %v476 = vld [vmem:[#allocation7 + $0xd4] sm:$0xf]
    %v477 = vld [vmem:[#allocation7 + $0xd8] sm:$0xf]
    %v478 = vld [vmem:[#allocation7 + $0xdc] sm:$0xf]
    %v479 = vld [vmem:[#allocation7 + $0xe0] sm:$0xf]
    %v480 = vld [vmem:[#allocation7 + $0xe4] sm:$0xf]
    %v481 = vld [vmem:[#allocation7 + $0xe8] sm:$0xf]
    %v482 = vld [vmem:[#allocation7 + $0xec] sm:$0xf]
    %v483 = vld [vmem:[#allocation7 + $0xf0] sm:$0xf]
    %v484 = vld [vmem:[#allocation7 + $0xf4] sm:$0xf]
    %v485 = vld [vmem:[#allocation7 + $0xf8] sm:$0xf]
    %v486 = vld [vmem:[#allocation7 + $0xfc] sm:$0xf]
    %v487 = vld [vmem:[%s4] sm:$0x1]
    %v489 = vlaneseq
    %v490 = vshrl.u32 %v489, 7
    %v491 = vsub.s32 0, %v490
    %v492 = vrot.slane %v487, %v491
    %v558 = vunpack.c.l.b16 %v423
    %v559 = vunpack.c.l.b16 %v424
    %v560 = vunpack.c.l.b16 %v425
    %v561 = vunpack.c.l.b16 %v426
    %v562 = vunpack.c.l.b16 %v427
    %v563 = vunpack.c.l.b16 %v428
    %v564 = vunpack.c.l.b16 %v429
    %v565 = vunpack.c.l.b16 %v430
    %v566 = vunpack.c.l.b16 %v431
    %v567 = vunpack.c.l.b16 %v432
    %v568 = vunpack.c.l.b16 %v433
    %v569 = vunpack.c.l.b16 %v434
    %v570 = vunpack.c.l.b16 %v435
    %v571 = vunpack.c.l.b16 %v436
    %v572 = vunpack.c.l.b16 %v437
    %v573 = vunpack.c.l.b16 %v438
    %v574 = vunpack.c.l.b16 %v439
    %v575 = vunpack.c.l.b16 %v440
    %v576 = vunpack.c.l.b16 %v441
    %v577 = vunpack.c.l.b16 %v442
    %v578 = vunpack.c.l.b16 %v443
    %v579 = vunpack.c.l.b16 %v444
    %v580 = vunpack.c.l.b16 %v445
    %v581 = vunpack.c.l.b16 %v446
    %v582 = vunpack.c.l.b16 %v447
    %v583 = vunpack.c.l.b16 %v448
    %v584 = vunpack.c.l.b16 %v449
    %v585 = vunpack.c.l.b16 %v450
    %v586 = vunpack.c.l.b16 %v451
    %v587 = vunpack.c.l.b16 %v452
    %v588 = vunpack.c.l.b16 %v453
    %v589 = vunpack.c.l.b16 %v454
    %v590 = vunpack.c.l.b16 %v455
    %v591 = vunpack.c.l.b16 %v456
    %v592 = vunpack.c.l.b16 %v457
    %v593 = vunpack.c.l.b16 %v458
    %v594 = vunpack.c.l.b16 %v459
    %v595 = vunpack.c.l.b16 %v460
    %v596 = vunpack.c.l.b16 %v461
    %v597 = vunpack.c.l.b16 %v462
    %v598 = vunpack.c.l.b16 %v463
    %v599 = vunpack.c.l.b16 %v464
    %v600 = vunpack.c.l.b16 %v465
    %v601 = vunpack.c.l.b16 %v466
    %v602 = vunpack.c.l.b16 %v467
    %v603 = vunpack.c.l.b16 %v468
    %v604 = vunpack.c.l.b16 %v469
    %v605 = vunpack.c.l.b16 %v470
    %v606 = vunpack.c.l.b16 %v471
    %v607 = vunpack.c.l.b16 %v472
    %v608 = vunpack.c.l.b16 %v473
    %v609 = vunpack.c.l.b16 %v474
    %v610 = vunpack.c.l.b16 %v475
    %v611 = vunpack.c.l.b16 %v476
    %v612 = vunpack.c.l.b16 %v477
    %v613 = vunpack.c.l.b16 %v478
    %v614 = vunpack.c.l.b16 %v479
    %v615 = vunpack.c.l.b16 %v480
    %v616 = vunpack.c.l.b16 %v481
    %v617 = vunpack.c.l.b16 %v482
    %v618 = vunpack.c.l.b16 %v483
    %v619 = vunpack.c.l.b16 %v484
    %v620 = vunpack.c.l.b16 %v485
    %v621 = vunpack.c.l.b16 %v486
    %v622 = vpack.c.b16 %v559, %v558
    %v623 = vpack.c.b16 %v561, %v560
    %v624 = vpack.c.b16 %v563, %v562
    %v625 = vpack.c.b16 %v565, %v564
    %v626 = vpack.c.b16 %v567, %v566
    %v627 = vpack.c.b16 %v569, %v568
    %v628 = vpack.c.b16 %v571, %v570
    %v629 = vpack.c.b16 %v573, %v572
    %v630 = vpack.c.b16 %v575, %v574
    %v631 = vpack.c.b16 %v577, %v576
    %v632 = vpack.c.b16 %v579, %v578
    %v633 = vpack.c.b16 %v581, %v580
    %v634 = vpack.c.b16 %v583, %v582
    %v635 = vpack.c.b16 %v585, %v584
    %v636 = vpack.c.b16 %v587, %v586
    %v637 = vpack.c.b16 %v589, %v588
    %v638 = vpack.c.b16 %v591, %v590
    %v639 = vpack.c.b16 %v593, %v592
    %v640 = vpack.c.b16 %v595, %v594
    %v641 = vpack.c.b16 %v597, %v596
    %v642 = vpack.c.b16 %v599, %v598
    %v643 = vpack.c.b16 %v601, %v600
    %v644 = vpack.c.b16 %v603, %v602
    %v645 = vpack.c.b16 %v605, %v604
    %v646 = vpack.c.b16 %v607, %v606
    %v647 = vpack.c.b16 %v609, %v608
    %v648 = vpack.c.b16 %v611, %v610
    %v649 = vpack.c.b16 %v613, %v612
    %v650 = vpack.c.b16 %v615, %v614
    %v651 = vpack.c.b16 %v617, %v616
    %v652 = vpack.c.b16 %v619, %v618
    %v653 = vpack.c.b16 %v621, %v620
    %686 = vmatprep.subr.bf16.mxu0 0
    %687 = vmatpush1.bf16.msra.mxu0 %v622
    %688 = vmatprep.subr.bf16.mxu0 0
    %689 = vmatpush1.bf16.msra.mxu0 %v623
    %690 = vmatprep.subr.bf16.mxu0 0
    %691 = vmatpush1.bf16.msra.mxu0 %v624
    %692 = vmatprep.subr.bf16.mxu0 0
    %693 = vmatpush1.bf16.msra.mxu0 %v625
    %694 = vmatprep.subr.bf16.mxu0 0
    %695 = vmatpush1.bf16.msra.mxu0 %v626
    %696 = vmatprep.subr.bf16.mxu0 0
    %697 = vmatpush1.bf16.msra.mxu0 %v627
    %698 = vmatprep.subr.bf16.mxu0 0
    %699 = vmatpush1.bf16.msra.mxu0 %v628
    %700 = vmatprep.subr.bf16.mxu0 0
    %701 = vmatpush1.bf16.msra.mxu0 %v629
    %702 = vmatprep.subr.bf16.mxu0 0
    %703 = vmatpush1.bf16.msra.mxu0 %v630
    %704 = vmatprep.subr.bf16.mxu0 0
    %705 = vmatpush1.bf16.msra.mxu0 %v631
    %706 = vmatprep.subr.bf16.mxu0 0
    %707 = vmatpush1.bf16.msra.mxu0 %v632
    %708 = vmatprep.subr.bf16.mxu0 0
    %709 = vmatpush1.bf16.msra.mxu0 %v633
    %710 = vmatprep.subr.bf16.mxu0 0
    %711 = vmatpush1.bf16.msra.mxu0 %v634
    %712 = vmatprep.subr.bf16.mxu0 0
    %713 = vmatpush1.bf16.msra.mxu0 %v635
    %714 = vmatprep.subr.bf16.mxu0 0
    %715 = vmatpush1.bf16.msra.mxu0 %v636
    %716 = vmatprep.subr.bf16.mxu0 0
    %717 = vmatpush1.bf16.msra.mxu0 %v637
    %718 = vmatprep.mubr.bf16.mxu0 %v416
    %719 = vmatmul.mubr.bf16.gmra.mrb[0].mxu0 %v415
    %v720 = vpop.f32.mrb[0].mxu0
    %v721 = vadd.f32 %v492, %v720
    %v722 = vpop.f32.mrb[0].mxu0
    %v723 = vpop.f32.mrb[0].mxu0
    %v724 = vadd.f32 %v492, %v723
    %v725 = vpop.f32.mrb[0].mxu0
    %726 = vmatprep.mubr.bf16.mxu0 %v420
    %727 = vmatmul.mubr.bf16.gmra.mrb[0].mxu0 %v419
    %v728 = vpop.f32.mrb[0].mxu0
    %v729 = vadd.f32 %v492, %v728
    %v730 = vpop.f32.mrb[0].mxu0
    %v731 = vpop.f32.mrb[0].mxu0
    %v732 = vadd.f32 %v492, %v731
    %v733 = vpop.f32.mrb[0].mxu0
    %734 = vdwg.mxu0
    %735 = vmatprep.subr.bf16.mxu0 0
    %736 = vmatpush1.bf16.msra.mxu0 %v638
    %737 = vmatprep.subr.bf16.mxu0 0
    %738 = vmatpush1.bf16.msra.mxu0 %v639
    %739 = vmatprep.subr.bf16.mxu0 0
    %740 = vmatpush1.bf16.msra.mxu0 %v640
    %741 = vmatprep.subr.bf16.mxu0 0
    %742 = vmatpush1.bf16.msra.mxu0 %v641
    %743 = vmatprep.subr.bf16.mxu0 0
    %744 = vmatpush1.bf16.msra.mxu0 %v642
    %745 = vmatprep.subr.bf16.mxu0 0
    %746 = vmatpush1.bf16.msra.mxu0 %v643
    %747 = vmatprep.subr.bf16.mxu0 0
    %748 = vmatpush1.bf16.msra.mxu0 %v644
    %749 = vmatprep.subr.bf16.mxu0 0
    %750 = vmatpush1.bf16.msra.mxu0 %v645
    %751 = vmatprep.subr.bf16.mxu0 0
    %752 = vmatpush1.bf16.msra.mxu0 %v646
    %753 = vmatprep.subr.bf16.mxu0 0
    %754 = vmatpush1.bf16.msra.mxu0 %v647
    %755 = vmatprep.subr.bf16.mxu0 0
    %756 = vmatpush1.bf16.msra.mxu0 %v648
    %757 = vmatprep.subr.bf16.mxu0 0
    %758 = vmatpush1.bf16.msra.mxu0 %v649
    %759 = vmatprep.subr.bf16.mxu0 0
    %760 = vmatpush1.bf16.msra.mxu0 %v650
    %761 = vmatprep.subr.bf16.mxu0 0
    %762 = vmatpush1.bf16.msra.mxu0 %v651
    %763 = vmatprep.subr.bf16.mxu0 0
    %764 = vmatpush1.bf16.msra.mxu0 %v652
    %765 = vmatprep.subr.bf16.mxu0 0
    %766 = vmatpush1.bf16.msra.mxu0 %v653
    %767 = vmatprep.mubr.bf16.mxu0 %v418
    %768 = vmatmul.mubr.bf16.gmra.mrb[0].mxu0 %v417
    %v769 = vpop.f32.mrb[0].mxu0
    %v770 = vadd.f32 %v721, %v769
    %v771 = vpop.f32.mrb[0].mxu0
    %v772 = vpop.f32.mrb[0].mxu0
    %v773 = vadd.f32 %v724, %v772
    %v774 = vpop.f32.mrb[0].mxu0
    %775 = vmatprep.mubr.bf16.mxu0 %v422
    %776 = vmatmul.mubr.bf16.gmra.mrb[0].mxu0 %v421
    %v777 = vpop.f32.mrb[0].mxu0
    %v778 = vadd.f32 %v729, %v777
    %v779 = vpop.f32.mrb[0].mxu0
    %v780 = vpop.f32.mrb[0].mxu0
    %v781 = vadd.f32 %v732, %v780
    %v782 = vpop.f32.mrb[0].mxu0
    %783 = vdwg.mxu0
    %784 = vst [vmem:[#allocation8] sm:$0xff] %v770
    %785 = vst [vmem:[#allocation8 + $0x8] sm:$0xff] %v773
    %786 = vst [vmem:[#allocation8 + $0x10] sm:$0xff] %v778
    %787 = vst [vmem:[#allocation8 + $0x18] sm:$0xff] %v781
    // Predicated region
    $region34: #{tpu_custom_call.1} parent=1 // pred_check
      _
    $region35: #{tpu_custom_call.1} parent=1 // pred_check_branch
      %789 = sbr.rel (0) target = $region37
    $region36: #{tpu_custom_call.1} parent=1 // pred_region
      %s791 = ssub.s32 512, 512
      %792 = vsyncadd [#allocation4], %s791
      %s793 = sshll.u32 [#allocation8], 4
      %s794 = int_to_ptr.vmem [resolvable:$true] %s793
      %799 = dma.vmem_to_hbm [thread:$0]  %s794, 512, %s5, [#allocation4], 128, 128, 8
    $region37: #{tpu_custom_call.1} parent=1 // pred_fallthru
      _
    // Predicated region
    $region38: #{tpu_custom_call.1} parent=1 // pred_check
      _
    $region39: #{tpu_custom_call.1} parent=1 // pred_check_branch
      %801 = sbr.rel (0) target = $region41
    $region40: #{tpu_custom_call.1} parent=1 // pred_region
      %802 = dma.done [#allocation4], 512
    $region41: #{tpu_custom_call.1} parent=1 // pred_fallthru
      _
    %803 = vsyncpa [#allocation3], 1
    %804 = vsyncpa [#allocation6], 1
    %805 = vsyncpa [#allocation4], 1

</llo_original>
